<compile_context>
chip_gen: v7x
topology: tpu7x:2x2x1
jax: 0.10.0
libtpu: 0.0.40
codegen_flags: <defaults>
</compile_context>

<pallas_src>
import functools

import jax
import jax.numpy as jnp
from jax.experimental import pallas as pl
from jax.experimental.pallas import tpu as pltpu

GROWTH = 32
BN_SIZE = 4
BOTTLENECK = BN_SIZE * GROWTH           # 128
BLOCK_CONFIG = (6, 12, 24, 16)
INIT_FEATURES = 64
BN_EPS = 1e-5


def _pick_tm(m):
    """Row-tile size: tile only when M is already a multiple of the tile, else full M."""
    for t in (256, 128):
        if m % t == 0 and m > t:
            return t
    return m


# ----------------------------------------------------------------------------- #
# Pallas kernels
# ----------------------------------------------------------------------------- #
def _gemm_kernel(has_pre, has_post, a_ref, *refs):
    """o = [relu(a*s1+b1)] @ b, optionally followed by relu(. * s2 + b2).

    Single full-K block per call, so the per-channel scale/bias vectors apply to the
    whole K (no K-block slicing needed).
    """
    i = 0
    if has_pre:
        s1_ref, b1_ref = refs[i], refs[i + 1]
        i += 2
    b_ref = refs[i]
    i += 1
    if has_post:
        s2_ref, b2_ref = refs[i], refs[i + 1]
        i += 2
    o_ref = refs[i]

    a = a_ref[...]
    if has_pre:                                   # fused pre-activation BN + ReLU
        a = jnp.maximum(a * s1_ref[...] + b1_ref[...], 0.0)
    y = jnp.dot(a, b_ref[...], preferred_element_type=jnp.float32)
    if has_post:                                  # fused BN + ReLU on the conv output
        y = jnp.maximum(y * s2_ref[...] + b2_ref[...], 0.0)
    o_ref[...] = y.astype(o_ref.dtype)


def fused_gemm(a, b, pre=None, post=None):
    """(M,K) @ (K,N) Pallas GEMM with optional fused BN+ReLU prologue / epilogue.

    K and N are single full-dimension blocks (no padding, no K reduction loop);
    only M is tiled, and only when already tile-aligned, so no pad/slice copies.
    """
    M, K = a.shape
    Kb, N = b.shape
    assert K == Kb
    tm = _pick_tm(M)
    has_pre = pre is not None
    has_post = post is not None

    args = [a]
    in_specs = [pl.BlockSpec((tm, K), lambda i: (i, 0))]
    if has_pre:
        s1, b1 = pre
        args += [s1.reshape(1, K), b1.reshape(1, K)]
        in_specs += [pl.BlockSpec((1, K), lambda i: (0, 0)),
                     pl.BlockSpec((1, K), lambda i: (0, 0))]
    args.append(b)
    in_specs.append(pl.BlockSpec((K, N), lambda i: (0, 0)))
    if has_post:
        s2, b2 = post
        args += [s2.reshape(1, N), b2.reshape(1, N)]
        in_specs += [pl.BlockSpec((1, N), lambda i: (0, 0)),
                     pl.BlockSpec((1, N), lambda i: (0, 0))]

    return pl.pallas_call(
        functools.partial(_gemm_kernel, has_pre, has_post),
        out_shape=jax.ShapeDtypeStruct((M, N), jnp.float32),
        grid=(M // tm,),
        in_specs=in_specs,
        out_specs=pl.BlockSpec((tm, N), lambda i: (i, 0)),
        compiler_params=pltpu.CompilerParams(dimension_semantics=("parallel",)),
    )(*args)


def _head_kernel(x_ref, s5_ref, b5_ref, w1_ref, b1_ref, w2_ref, b2_ref, o_ref):
    # bn5 + ReLU -> global average pool -> Linear(1024,32) -> ReLU -> Linear(32,1)
    # -> Softmax(dim=1).  (Softmax over a single logit is identically 1.0; kept for
    # fidelity to the PyTorch module.)
    v = jnp.maximum(x_ref[...] * s5_ref[...] + b5_ref[...], 0.0)        # (N, HW, C)
    feats = jnp.mean(v, axis=1)                                          # (N, C)
    h = jnp.dot(feats, w1_ref[...], preferred_element_type=jnp.float32) + b1_ref[...]
    h = jnp.maximum(h, 0.0)                                              # (N, 32)
    logits = jnp.sum(h * w2_ref[...], axis=1, keepdims=True) + b2_ref[...]  # (N, 1)
    m = jnp.max(logits, axis=1, keepdims=True)
    e = jnp.exp(logits - m)
    o_ref[...] = e / jnp.sum(e, axis=1, keepdims=True)


def pallas_head(x3, s5, b5, w1, b1, w2, b2):
    N, HW, C = x3.shape
    H = w1.shape[1]
    return pl.pallas_call(
        _head_kernel,
        out_shape=jax.ShapeDtypeStruct((N, 1), jnp.float32),
        grid=(1,),
        in_specs=[pl.BlockSpec((N, HW, C), lambda i: (0, 0, 0)),
                  pl.BlockSpec((1, 1, C), lambda i: (0, 0, 0)),
                  pl.BlockSpec((1, 1, C), lambda i: (0, 0, 0)),
                  pl.BlockSpec((C, H), lambda i: (0, 0)),
                  pl.BlockSpec((1, H), lambda i: (0, 0)),
                  pl.BlockSpec((1, H), lambda i: (0, 0)),
                  pl.BlockSpec((1, 1), lambda i: (0, 0))],
        out_specs=pl.BlockSpec((N, 1), lambda i: (0, 0)),
    )(x3, s5.reshape(1, 1, C), b5.reshape(1, 1, C),
      w1, b1.reshape(1, H), w2.reshape(1, H), b2.reshape(1, 1))


# ----------------------------------------------------------------------------- #
# Glue: im2col patch extraction and pooling (not the hot path)
# ----------------------------------------------------------------------------- #
def _im2col(x, kh, kw, stride, pad):
    # x: NHWC -> (N, Ho, Wo, kh*kw*C); feature order (i, j, c) matches HWIO weights.
    if pad:
        x = jnp.pad(x, ((0, 0), (pad, pad), (pad, pad), (0, 0)))
    N, H, W, C = x.shape
    Ho = (H - kh) // stride + 1
    Wo = (W - kw) // stride + 1
    cols = [x[:, i:i + stride * Ho:stride, j:j + stride * Wo:stride, :]
            for i in range(kh) for j in range(kw)]
    return jnp.concatenate(cols, axis=-1), Ho, Wo


def max_pool_3x3_s2_p1(x):
    return jax.lax.reduce_window(
        x, -jnp.inf, jax.lax.max,
        window_dimensions=(1, 3, 3, 1), window_strides=(1, 2, 2, 1),
        padding=[(0, 0), (1, 1), (1, 1), (0, 0)])


def avg_pool_2x2(x):
    s = jax.lax.reduce_window(
        x, 0.0, jax.lax.add,
        window_dimensions=(1, 2, 2, 1), window_strides=(1, 2, 2, 1), padding="VALID")
    return s / 4.0


# ----------------------------------------------------------------------------- #
# Network stages (each jitted once per distinct shape)
# ----------------------------------------------------------------------------- #
@jax.jit
def stem(x_nchw, w, scale, bias):
    x = jnp.transpose(x_nchw, (0, 2, 3, 1)).astype(jnp.float32)     # NCHW -> NHWC
    cols, Ho, Wo = _im2col(x, 7, 7, 2, 3)
    N = x.shape[0]
    cout = w.shape[-1]
    # conv0 + bn0 + relu fused as a GEMM epilogue.
    y = fused_gemm(cols.reshape(N * Ho * Wo, -1), w.reshape(-1, cout),
                   post=(scale, bias))
    return max_pool_3x3_s2_p1(y.reshape(N, Ho, Wo, cout))


@jax.jit
def dense_layer(x, s1, b1, w1, s2, b2, w2):
    N, H, W, C = x.shape
    M = N * H * W
    # bn1+relu (prologue) -> 1x1 conv -> bn2+relu (epilogue): one GEMM kernel.
    h = fused_gemm(x.reshape(M, C), w1.reshape(C, BOTTLENECK),
                   pre=(s1, b1), post=(s2, b2))
    h = h.reshape(N, H, W, BOTTLENECK)
    # 3x3 conv (stride 1, pad 1) on the already-activated bottleneck; zero spatial
    # padding is correct here because activation was applied before the conv.
    cols, _, _ = _im2col(h, 3, 3, 1, 1)
    y = fused_gemm(cols.reshape(M, 9 * BOTTLENECK), w2.reshape(9 * BOTTLENECK, GROWTH))
    return jnp.concatenate([x, y.reshape(N, H, W, GROWTH)], axis=-1)


@jax.jit
def transition(x, scale, bias, w):
    N, H, W, C = x.shape
    cout = w.shape[-1]
    # bn+relu (prologue) -> 1x1 conv in one GEMM kernel, then 2x2 avg pool.
    y = fused_gemm(x.reshape(-1, C), w.reshape(C, cout), pre=(scale, bias))
    return avg_pool_2x2(y.reshape(N, H, W, cout))


@jax.jit
def head(x, s5, b5, w1, b1, w2, b2):
    N, H, W, C = x.shape
    return pallas_head(x.reshape(N, H * W, C), s5, b5, w1, b1, w2, b2)


# ----------------------------------------------------------------------------- #
# Parameters (deterministic init; folded inference-mode BN)
# ----------------------------------------------------------------------------- #
def _make_bn(key, c):
    k1, k2, k3, k4 = jax.random.split(key, 4)
    gamma = jax.random.uniform(k1, (c,), minval=0.8, maxval=1.2, dtype=jnp.float32)
    beta = 0.1 * jax.random.normal(k2, (c,), dtype=jnp.float32)
    running_mean = 0.1 * jax.random.normal(k3, (c,), dtype=jnp.float32)
    running_var = jax.random.uniform(k4, (c,), minval=0.8, maxval=1.2, dtype=jnp.float32)
    scale = gamma / jnp.sqrt(running_var + BN_EPS)
    bias = beta - running_mean * scale
    return scale, bias


def _make_conv(key, kh, kw, cin, cout):
    std = (2.0 / (kh * kw * cin)) ** 0.5  # kaiming-normal fan_in, relu
    return std * jax.random.normal(key, (kh, kw, cin, cout), dtype=jnp.float32)


def init_params(seed=0):
    keys = iter(jax.random.split(jax.random.PRNGKey(seed), 1024))
    nk = lambda: next(keys)
    p = {}
    p["conv0"] = _make_conv(nk(), 7, 7, 3, INIT_FEATURES)
    p["bn0"] = _make_bn(nk(), INIT_FEATURES)
    c = INIT_FEATURES
    for bi, n_layers in enumerate(BLOCK_CONFIG):
        layers = []
        for _ in range(n_layers):
            lp = {
                "bn1": _make_bn(nk(), c),
                "conv1": _make_conv(nk(), 1, 1, c, BOTTLENECK),
                "bn2": _make_bn(nk(), BOTTLENECK),
                "conv2": _make_conv(nk(), 3, 3, BOTTLENECK, GROWTH),
            }
            layers.append(lp)
            c += GROWTH
        p[f"block{bi}"] = layers
        if bi != len(BLOCK_CONFIG) - 1:
            p[f"trans{bi}"] = {
                "bn": _make_bn(nk(), c),
                "conv": _make_conv(nk(), 1, 1, c, c // 2),
            }
            c //= 2
    p["bn5"] = _make_bn(nk(), c)          # c == 1024 == densenet121 classifier in_features
    lim1 = 1.0 / (c ** 0.5)
    p["fc1_w"] = jax.random.uniform(nk(), (c, 32), minval=-lim1, maxval=lim1, dtype=jnp.float32)
    p["fc1_b"] = jax.random.uniform(nk(), (32,), minval=-lim1, maxval=lim1, dtype=jnp.float32)
    lim2 = 1.0 / (32 ** 0.5)
    p["fc2_w"] = jax.random.uniform(nk(), (32, 1), minval=-lim2, maxval=lim2, dtype=jnp.float32)
    p["fc2_b"] = jax.random.uniform(nk(), (1,), minval=-lim2, maxval=lim2, dtype=jnp.float32)
    return p


# ----------------------------------------------------------------------------- #
# Forward pass
# ----------------------------------------------------------------------------- #
def densenet_forward(params, x_nchw):
    x = stem(x_nchw, params["conv0"], *params["bn0"])
    for bi, n_layers in enumerate(BLOCK_CONFIG):
        for li in range(n_layers):
            lp = params[f"block{bi}"][li]
            x = dense_layer(x, *lp["bn1"], lp["conv1"], *lp["bn2"], lp["conv2"])
        if bi != len(BLOCK_CONFIG) - 1:
            tp = params[f"trans{bi}"]
            x = transition(x, *tp["bn"], tp["conv"])
    return head(x, *params["bn5"], params["fc1_w"], params["fc1_b"],
                params["fc2_w"], params["fc2_b"])   # (N, 1)


if __name__ == "__main__":
    params = init_params(seed=0)
    # 32x32 is the smallest spatial size that survives DenseNet-121's 5 downsamplings.
    x = jax.random.normal(jax.random.PRNGKey(0), (2, 3, 32, 32), dtype=jnp.float32)
    out = densenet_forward(params, x)
    out = jax.block_until_ready(out)
    assert out.shape == (2, 1), out.shape
    assert bool(jnp.all(jnp.isfinite(out)))
    print("KERNEL_OK")
</pallas_src>

<mosaic_0001>
module attributes {stable_mosaic.version = 11 : i64} {
  func.func @_gemm_kernel(%arg0: i32, %arg1: memref<256x147xf32, #tpu.memory_space<vmem>>, %arg2: memref<147x64xf32, #tpu.memory_space<vmem>>, %arg3: memref<1x64xf32, #tpu.memory_space<vmem>>, %arg4: memref<1x64xf32, #tpu.memory_space<vmem>>, %arg5: memref<256x64xf32, #tpu.memory_space<vmem>>) attributes {dimension_semantics = [#tpu.dimension_semantics<parallel>], iteration_bounds = array<i64: 2>, scalar_prefetch = 0 : i64, scratch_operands = 0 : i64, tpu.core_type = #tpu.core_type<tc>, window_params = [{transform_indices = @transform_0, window_bounds = array<i64: 256, 147>}, {pipeline_mode = #tpu.pipeline_mode<synchronous>, transform_indices = @transform_1, window_bounds = array<i64: 147, 64>}, {pipeline_mode = #tpu.pipeline_mode<synchronous>, transform_indices = @transform_2, window_bounds = array<i64: 1, 64>}, {pipeline_mode = #tpu.pipeline_mode<synchronous>, transform_indices = @transform_3, window_bounds = array<i64: 1, 64>}, {transform_indices = @transform_4, window_bounds = array<i64: 256, 64>}]} {
    %c0 = arith.constant 0 : index
    %c0_0 = arith.constant 0 : index
    %0 = vector.load %arg1[%c0, %c0_0] : memref<256x147xf32, #tpu.memory_space<vmem>>, vector<256x147xf32>
    %c0_1 = arith.constant 0 : index
    %c0_2 = arith.constant 0 : index
    %1 = vector.load %arg2[%c0_1, %c0_2] : memref<147x64xf32, #tpu.memory_space<vmem>>, vector<147x64xf32>
    %cst = arith.constant dense<0.000000e+00> : vector<256x64xf32>
    %2 = tpu.matmul %0, %1, %cst {dimension_numbers = #tpu.dot_dimension_numbers<[1], [0], [0], [1], [0, 0, 1, 1], [], []>} : vector<256x147xf32>, vector<147x64xf32>, vector<256x64xf32> -> vector<256x64xf32>
    %c0_3 = arith.constant 0 : index
    %c0_4 = arith.constant 0 : index
    %3 = vector.load %arg3[%c0_3, %c0_4] : memref<1x64xf32, #tpu.memory_space<vmem>>, vector<1x64xf32>
    %4 = vector.broadcast %3 : vector<1x64xf32> to vector<256x64xf32>
    %5 = arith.mulf %2, %4 : vector<256x64xf32>
    %c0_5 = arith.constant 0 : index
    %c0_6 = arith.constant 0 : index
    %6 = vector.load %arg4[%c0_5, %c0_6] : memref<1x64xf32, #tpu.memory_space<vmem>>, vector<1x64xf32>
    %7 = vector.broadcast %6 : vector<1x64xf32> to vector<256x64xf32>
    %8 = arith.addf %5, %7 : vector<256x64xf32>
    %cst_7 = arith.constant 0.000000e+00 : f32
    %9 = vector.broadcast %cst_7 : f32 to vector<256x64xf32>
    %10 = arith.maximumf %8, %9 : vector<256x64xf32>
    %c0_8 = arith.constant 0 : index
    %c0_9 = arith.constant 0 : index
    %11 = vector.load %arg5[%c0_8, %c0_9] : memref<256x64xf32, #tpu.memory_space<vmem>>, vector<256x64xf32>
    tpu.vector_store %arg5[%c0_8, %c0_9], %10 {strides = array<i32>} : memref<256x64xf32, #tpu.memory_space<vmem>>, vector<256x64xf32>,
    return
  }
  func.func @transform_0(%arg0: i32) -> (i32, i32) {
    %c0_i32 = arith.constant 0 : i32
    %c0_i32_0 = arith.constant 0 : i32
    return %arg0, %c0_i32 : i32, i32
  }
  func.func @transform_1(%arg0: i32) -> (i32, i32) {
    %c0_i32 = arith.constant 0 : i32
    %c0_i32_0 = arith.constant 0 : i32
    %c0_i32_1 = arith.constant 0 : i32
    return %c0_i32, %c0_i32_0 : i32, i32
  }
  func.func @transform_2(%arg0: i32) -> (i32, i32) {
    %c0_i32 = arith.constant 0 : i32
    %c0_i32_0 = arith.constant 0 : i32
    %c0_i32_1 = arith.constant 0 : i32
    return %c0_i32, %c0_i32_0 : i32, i32
  }
  func.func @transform_3(%arg0: i32) -> (i32, i32) {
    %c0_i32 = arith.constant 0 : i32
    %c0_i32_0 = arith.constant 0 : i32
    %c0_i32_1 = arith.constant 0 : i32
    return %c0_i32, %c0_i32_0 : i32, i32
  }
  func.func @transform_4(%arg0: i32) -> (i32, i32) {
    %c0_i32 = arith.constant 0 : i32
    %c0_i32_0 = arith.constant 0 : i32
    return %arg0, %c0_i32 : i32, i32
  }
}

</mosaic_0001>

<llo_original>
// kernel: stem.1
$region0: #{stem.1}
  #allocation0 [shape = 'u32[]', space=smem, size = 0x4, offset = 0x4, fixed_abs, tag = 'smem constant byte address 0x4 - core index']
  #allocation1 [shape = 'u32[144,128]{1,0:T(1,128)}', space=vmem, size = 0x12000, scoped, tag = 'internal scratch']
  %s0 = inlined_call_operand.vmem [shape: f32[512,147], index: 0, kind: input, shape index: {}]
  %s1 = inlined_call_operand.vmem [shape: f32[147,64], index: 1, kind: input, shape index: {}]
  %s2 = inlined_call_operand.vmem [shape: f32[1,64], index: 2, kind: input, shape index: {}]
  %s3 = inlined_call_operand.vmem [shape: f32[1,64], index: 3, kind: input, shape index: {}]
  %s4 = inlined_call_operand.vmem [shape: f32[512,64], index: 4, kind: output, shape index: {}]
  %s5 = sld [smem:[#allocation0]]
  $region49: #{stem.1} parent=0
    _
  %s7 = ssub.s32 1, %s5
  %s8 = scalar_select 0, %s7, %s5
  loop: start=0, step=1, limit=4
  $region2: #{stem.1} parent=0 // loop_pre_header
    _
  $region3: #{stem.1} parent=0 // loop_header
    %s10 = sphi 0, %s14
    %p11 = scmp.ge.s32.totalorder %s10, 4
    %s20 = sphi 0, %s22
    %s23 = sphi 0, %s20
    %s24 = sphi 0, %s23
    %s40 = sphi 0, %s24
    %s44 = sphi 0, %s44
    %s46 = sphi 0, %s44
    %s47 = sphi 0, %s46
    %s61 = sphi 0, %s47
    %s65 = sphi 0, %s65
    %s67 = sphi 0, %s65
    %s68 = sphi 0, %s67
    %s82 = sphi 0, %s68
    %s86 = sphi 0, %s86
    %s88 = sphi 0, %s86
    %s89 = sphi 0, %s88
    %s103 = sphi 0, %s89
    %s109 = sphi 0, %s111
    %s112 = sphi 0, %s109
    %s113 = sphi 0, %s112
    %s129 = sphi 0, %s113
  $region4: #{stem.1} parent=0 // loop_header_branch
    %13 = sbr.rel (%p11) target = $region8
  $region5: #{stem.1} parent=0 // loop_body
    %s15 = ssub.s32 %s10, 1
    %s16 = ssub.s32 %s10, 2
    %s17 = sadd.s32 %s10, 1
    %s18 = ssub.s32 %s10, %s17
    %p19 = scmp.eq.s32.totalorder %s18, 0
    %s21 = sadd.s32 %s20, 1
    %s22 = scalar_select %p19, %s20, %s21
    %p25 = pneg %p19
    %p26 = scmp.eq.s32.totalorder %s10, 1
    %p27 = por %p25, %p26
    %p28 = scmp.ne.s32.totalorder %s20, %s23
    %p29 = scmp.eq.s32.totalorder %s10, 0
    %p30 = por %p28, %p29
    %p31 = scmp.ne.s32.totalorder %s20, %s23
    %p32 = scmp.eq.s32.totalorder %s15, 1
    %p33 = por %p31, %p32
    %p34 = scmp.ne.s32.totalorder %s23, %s24
    %p35 = scmp.eq.s32.totalorder %s15, 0
    %p36 = por %p34, %p35
    %p37 = scmp.ne.s32.totalorder %s23, %s24
    %p38 = scmp.eq.s32.totalorder %s16, 1
    %p39 = por %p37, %p38
    %p41 = scmp.ne.s32.totalorder %s24, %s40
    %p42 = scmp.eq.s32.totalorder %s16, 0
    %p43 = por %p41, %p42
    %s45 = sadd.s32 %s44, 1
    %p48 = scmp.eq.s32.totalorder %s10, 1
    %p49 = scmp.ne.s32.totalorder %s44, %s46
    %p50 = scmp.eq.s32.totalorder %s10, 0
    %p51 = por %p49, %p50
    %p52 = scmp.ne.s32.totalorder %s44, %s46
    %p53 = scmp.eq.s32.totalorder %s15, 1
    %p54 = por %p52, %p53
    %p55 = scmp.ne.s32.totalorder %s46, %s47
    %p56 = scmp.eq.s32.totalorder %s15, 0
    %p57 = por %p55, %p56
    %p58 = scmp.ne.s32.totalorder %s46, %s47
    %p59 = scmp.eq.s32.totalorder %s16, 1
    %p60 = por %p58, %p59
    %p62 = scmp.ne.s32.totalorder %s47, %s61
    %p63 = scmp.eq.s32.totalorder %s16, 0
    %p64 = por %p62, %p63
    %s66 = sadd.s32 %s65, 1
    %p69 = scmp.eq.s32.totalorder %s10, 1
    %p70 = scmp.ne.s32.totalorder %s65, %s67
    %p71 = scmp.eq.s32.totalorder %s10, 0
    %p72 = por %p70, %p71
    %p73 = scmp.ne.s32.totalorder %s65, %s67
    %p74 = scmp.eq.s32.totalorder %s15, 1
    %p75 = por %p73, %p74
    %p76 = scmp.ne.s32.totalorder %s67, %s68
    %p77 = scmp.eq.s32.totalorder %s15, 0
    %p78 = por %p76, %p77
    %p79 = scmp.ne.s32.totalorder %s67, %s68
    %p80 = scmp.eq.s32.totalorder %s16, 1
    %p81 = por %p79, %p80
    %p83 = scmp.ne.s32.totalorder %s68, %s82
    %p84 = scmp.eq.s32.totalorder %s16, 0
    %p85 = por %p83, %p84
    %s87 = sadd.s32 %s86, 1
    %p90 = scmp.eq.s32.totalorder %s10, 1
    %p91 = scmp.ne.s32.totalorder %s86, %s88
    %p92 = scmp.eq.s32.totalorder %s10, 0
    %p93 = por %p91, %p92
    %p94 = scmp.ne.s32.totalorder %s86, %s88
    %p95 = scmp.eq.s32.totalorder %s15, 1
    %p96 = por %p94, %p95
    %p97 = scmp.ne.s32.totalorder %s88, %s89
    %p98 = scmp.eq.s32.totalorder %s15, 0
    %p99 = por %p97, %p98
    %p100 = scmp.ne.s32.totalorder %s88, %s89
    %p101 = scmp.eq.s32.totalorder %s16, 1
    %p102 = por %p100, %p101
    %p104 = scmp.ne.s32.totalorder %s89, %s103
    %p105 = scmp.eq.s32.totalorder %s16, 0
    %p106 = por %p104, %p105
    %s107 = ssub.s32 %s10, %s17
    %p108 = scmp.eq.s32.totalorder %s107, 0
    %s110 = sadd.s32 %s109, 1
    %s111 = scalar_select %p108, %s109, %s110
    %p114 = pneg %p108
    %p115 = scmp.eq.s32.totalorder %s10, 1
    %p116 = por %p114, %p115
    %p117 = scmp.ne.s32.totalorder %s109, %s112
    %p118 = scmp.eq.s32.totalorder %s10, 0
    %p119 = por %p117, %p118
    %p120 = scmp.ne.s32.totalorder %s109, %s112
    %p121 = scmp.eq.s32.totalorder %s15, 1
    %p122 = por %p120, %p121
    %p123 = scmp.ne.s32.totalorder %s112, %s113
    %p124 = scmp.eq.s32.totalorder %s15, 0
    %p125 = por %p123, %p124
    %p126 = scmp.ne.s32.totalorder %s112, %s113
    %p127 = scmp.eq.s32.totalorder %s16, 1
    %p128 = por %p126, %p127
    %p130 = scmp.ne.s32.totalorder %s113, %s129
    %p131 = scmp.eq.s32.totalorder %s16, 0
    %p132 = por %p130, %p131
    %p133 = scmp.le.s32.totalorder 1, %s10
    %p134 = scmp.lt.s32.totalorder %s10, 3
    %p135 = pnand %p133, %p134
    %p136 = pneg %p135
    // Predicated region
    $region9: #{stem.1} parent=5 // pred_check
      _
    $region10: #{stem.1} parent=5 // pred_check_branch
      %138 = sbr.rel (%p135) target = $region12
    $region11: #{stem.1} parent=5 // pred_region
      %s139 = ssub.s32 %s10, 1
      // Predicated region
      $region13: #{stem.1} parent=11 // pred_check
        %p140 = pneg %p57
      $region14: #{stem.1} parent=11 // pred_check_branch
        %142 = sbr.rel (%p140) target = $region16
      $region15: #{stem.1} parent=11 // pred_region
        _
      $region16: #{stem.1} parent=11 // pred_fallthru
        _
      // Predicated region
      $region17: #{stem.1} parent=11 // pred_check
        %p143 = pneg %p78
      $region18: #{stem.1} parent=11 // pred_check_branch
        %145 = sbr.rel (%p143) target = $region20
      $region19: #{stem.1} parent=11 // pred_region
        _
      $region20: #{stem.1} parent=11 // pred_fallthru
        _
      // Predicated region
      $region21: #{stem.1} parent=11 // pred_check
        %p146 = pneg %p99
      $region22: #{stem.1} parent=11 // pred_check_branch
        %148 = sbr.rel (%p146) target = $region24
      $region23: #{stem.1} parent=11 // pred_region
        _
      $region24: #{stem.1} parent=11 // pred_fallthru
        _
    $region12: #{stem.1} parent=5 // pred_fallthru
      _
    %p149 = scmp.lt.s32.totalorder %s10, 2
    // Predicated region
    $region25: #{stem.1} parent=5 // pred_check
      %p150 = pneg %p149
    $region26: #{stem.1} parent=5 // pred_check_branch
      %152 = sbr.rel (%p150) target = $region28
    $region27: #{stem.1} parent=5 // pred_region
      // Predicated region
      $region29: #{stem.1} parent=27 // pred_check
        %p153 = pneg %p30
      $region30: #{stem.1} parent=27 // pred_check_branch
        %155 = sbr.rel (%p153) target = $region32
      $region31: #{stem.1} parent=27 // pred_region
        %s156 = smul.u32 32, %s10
        %p157 = scmp.lt.s32.totalorder %s156, 63
        %s158 = scalar_select %p157, %s156, 63
        %s159 = smul.addr %s158, 2
        %s160 = smul.addr %s159, 8
        %s161 = scalar_lea.vmem %s0, %s160
        %s162 = smul.u32 32, %s10
      $region32: #{stem.1} parent=27 // pred_fallthru
        _
    $region28: #{stem.1} parent=5 // pred_fallthru
      _
    %p163 = scmp.le.s32.totalorder 1, %s10
    %p164 = scmp.lt.s32.totalorder %s10, 3
    %p165 = pnand %p163, %p164
    %p166 = pneg %p165
    // Predicated region
    $region33: #{stem.1} parent=5 // pred_check
      _
    $region34: #{stem.1} parent=5 // pred_check_branch
      %168 = sbr.rel (%p165) target = $region36
    $region35: #{stem.1} parent=5 // pred_region
      %s169 = ssub.s32 %s10, 1
      %s170 = smul.u32 32, %s15
      %p171 = scmp.lt.s32.totalorder %s170, 63
      %s172 = scalar_select %p171, %s170, 63
      %s173 = smul.addr %s172, 2
      %s174 = smul.addr %s173, 8
      %s175 = scalar_lea.vmem %s0, %s174
      %p176 = pneg %p36
      %p177 = pneg %p33
      %p178 = pneg %p57
      %p179 = pneg %p54
      %p180 = pneg %p78
      %p181 = pneg %p75
      %p182 = pneg %p99
      %p183 = pneg %p96
      %p184 = pneg %p125
      %p185 = pneg %p122
      %s186 = smul.u32 32, %s15
      %p187 = scmp.lt.s32.totalorder %s186, 63
      %s188 = scalar_select %p187, %s186, 63
      %s189 = smul.addr %s188, 8
      %s190 = scalar_lea.vmem %s4, %s189
      %s191 = smul.u32 32, %s15
      %p192 = scmp.lt.s32.totalorder %s191, 63
      %s193 = scalar_select %p192, %s191, 63
      %s194 = smul.addr %s193, 2
      %s195 = smul.addr %s194, 8
      %s196 = scalar_lea.vmem %s0, %s195
      %s197 = smul.u32 32, %s15
      %s198 = smul.u32 32, %s15
      %p199 = scmp.lt.s32.totalorder %s198, 63
      %s200 = scalar_select %p199, %s198, 63
      %s201 = smul.addr %s200, 8
      %s202 = scalar_lea.vmem %s4, %s201
      %s203 = smul.u32 32, %s15
      %v204 = vld [vmem:[%s196] sm:$0xff]
      %v205 = vld [vmem:[%s196 + $0x8] sm:$0xff]
      %v206 = vld [vmem:[%s196 + $0x10] sm:$0xff]
      %v207 = vld [vmem:[%s196 + $0x18] sm:$0xff]
      %v208 = vld [vmem:[%s196 + $0x20] sm:$0xff]
      %v209 = vld [vmem:[%s196 + $0x28] sm:$0xff]
      %v210 = vld [vmem:[%s196 + $0x30] sm:$0xff]
      %v211 = vld [vmem:[%s196 + $0x38] sm:$0xff]
      %v212 = vld [vmem:[%s196 + $0x40] sm:$0xff]
      %v213 = vld [vmem:[%s196 + $0x48] sm:$0xff]
      %v214 = vld [vmem:[%s196 + $0x50] sm:$0xff]
      %v215 = vld [vmem:[%s196 + $0x58] sm:$0xff]
      %v216 = vld [vmem:[%s196 + $0x60] sm:$0xff]
      %v217 = vld [vmem:[%s196 + $0x68] sm:$0xff]
      %v218 = vld [vmem:[%s196 + $0x70] sm:$0xff]
      %v219 = vld [vmem:[%s196 + $0x78] sm:$0xff]
      %v220 = vld [vmem:[%s196 + $0x80] sm:$0xff]
      %v221 = vld [vmem:[%s196 + $0x88] sm:$0xff]
      %v222 = vld [vmem:[%s196 + $0x90] sm:$0xff]
      %v223 = vld [vmem:[%s196 + $0x98] sm:$0xff]
      %v224 = vld [vmem:[%s196 + $0xa0] sm:$0xff]
      %v225 = vld [vmem:[%s196 + $0xa8] sm:$0xff]
      %v226 = vld [vmem:[%s196 + $0xb0] sm:$0xff]
      %v227 = vld [vmem:[%s196 + $0xb8] sm:$0xff]
      %v228 = vld [vmem:[%s196 + $0xc0] sm:$0xff]
      %v229 = vld [vmem:[%s196 + $0xc8] sm:$0xff]
      %v230 = vld [vmem:[%s196 + $0xd0] sm:$0xff]
      %v231 = vld [vmem:[%s196 + $0xd8] sm:$0xff]
      %v232 = vld [vmem:[%s196 + $0xe0] sm:$0xff]
      %v233 = vld [vmem:[%s196 + $0xe8] sm:$0xff]
      %v234 = vld [vmem:[%s196 + $0xf0] sm:$0xff]
      %v235 = vld [vmem:[%s196 + $0xf8] sm:$0xff]
      %v236 = vld [vmem:[%s196 + $0x100] sm:$0xff]
      %v237 = vld [vmem:[%s196 + $0x108] sm:$0xff]
      %v238 = vld [vmem:[%s196 + $0x110] sm:$0xff]
      %v239 = vld [vmem:[%s196 + $0x118] sm:$0xff]
      %v240 = vld [vmem:[%s196 + $0x120] sm:$0xff]
      %v241 = vld [vmem:[%s196 + $0x128] sm:$0xff]
      %v242 = vld [vmem:[%s196 + $0x130] sm:$0xff]
      %v243 = vld [vmem:[%s196 + $0x138] sm:$0xff]
      %v244 = vld [vmem:[%s196 + $0x140] sm:$0xff]
      %v245 = vld [vmem:[%s196 + $0x148] sm:$0xff]
      %v246 = vld [vmem:[%s196 + $0x150] sm:$0xff]
      %v247 = vld [vmem:[%s196 + $0x158] sm:$0xff]
      %v248 = vld [vmem:[%s196 + $0x160] sm:$0xff]
      %v249 = vld [vmem:[%s196 + $0x168] sm:$0xff]
      %v250 = vld [vmem:[%s196 + $0x170] sm:$0xff]
      %v251 = vld [vmem:[%s196 + $0x178] sm:$0xff]
      %v252 = vld [vmem:[%s196 + $0x180] sm:$0xff]
      %v253 = vld [vmem:[%s196 + $0x188] sm:$0xff]
      %v254 = vld [vmem:[%s196 + $0x190] sm:$0xff]
      %v255 = vld [vmem:[%s196 + $0x198] sm:$0xff]
      %v256 = vld [vmem:[%s196 + $0x1a0] sm:$0xff]
      %v257 = vld [vmem:[%s196 + $0x1a8] sm:$0xff]
      %v258 = vld [vmem:[%s196 + $0x1b0] sm:$0xff]
      %v259 = vld [vmem:[%s196 + $0x1b8] sm:$0xff]
      %v260 = vld [vmem:[%s196 + $0x1c0] sm:$0xff]
      %v261 = vld [vmem:[%s196 + $0x1c8] sm:$0xff]
      %v262 = vld [vmem:[%s196 + $0x1d0] sm:$0xff]
      %v263 = vld [vmem:[%s196 + $0x1d8] sm:$0xff]
      %v264 = vld [vmem:[%s196 + $0x1e0] sm:$0xff]
      %v265 = vld [vmem:[%s196 + $0x1e8] sm:$0xff]
      %v266 = vld [vmem:[%s196 + $0x1f0] sm:$0xff]
      %v267 = vld [vmem:[%s196 + $0x1f8] sm:$0xff]
      %v268 = vld [vmem:[%s1] sm:$0xff]
      %v269 = vld [vmem:[%s1 + $0x8] sm:$0xff]
      %v270 = vld [vmem:[%s1 + $0x10] sm:$0xff]
      %v271 = vld [vmem:[%s1 + $0x18] sm:$0xff]
      %v272 = vld [vmem:[%s1 + $0x20] sm:$0xff]
      %v273 = vld [vmem:[%s1 + $0x28] sm:$0xff]
      %v274 = vld [vmem:[%s1 + $0x30] sm:$0xff]
      %v275 = vld [vmem:[%s1 + $0x38] sm:$0xff]
      %v276 = vld [vmem:[%s1 + $0x40] sm:$0xff]
      %v277 = vld [vmem:[%s1 + $0x48] sm:$0xff]
      %v278 = vld [vmem:[%s1 + $0x50] sm:$0xff]
      %v279 = vld [vmem:[%s1 + $0x58] sm:$0xff]
      %v280 = vld [vmem:[%s1 + $0x60] sm:$0xff]
      %v281 = vld [vmem:[%s1 + $0x68] sm:$0xff]
      %v282 = vld [vmem:[%s1 + $0x70] sm:$0xff]
      %v283 = vld [vmem:[%s1 + $0x78] sm:$0xff]
      %v284 = vld [vmem:[%s1 + $0x80] sm:$0xff]
      %v285 = vld [vmem:[%s1 + $0x88] sm:$0xff]
      %v286 = vld [vmem:[%s1 + $0x90] sm:$0x7]
      %vm287 = vcmask 154624
      %v289 = vsel %vm287, %v205, 0
      %v292 = vsel %vm287, %v207, 0
      %v295 = vsel %vm287, %v209, 0
      %v298 = vsel %vm287, %v211, 0
      %v301 = vsel %vm287, %v213, 0
      %v304 = vsel %vm287, %v215, 0
      %v307 = vsel %vm287, %v217, 0
      %v310 = vsel %vm287, %v219, 0
      %v313 = vsel %vm287, %v221, 0
      %v316 = vsel %vm287, %v223, 0
      %v319 = vsel %vm287, %v225, 0
      %v322 = vsel %vm287, %v227, 0
      %v325 = vsel %vm287, %v229, 0
      %v328 = vsel %vm287, %v231, 0
      %v331 = vsel %vm287, %v233, 0
      %v334 = vsel %vm287, %v235, 0
      %v337 = vsel %vm287, %v237, 0
      %v340 = vsel %vm287, %v239, 0
      %v343 = vsel %vm287, %v241, 0
      %v346 = vsel %vm287, %v243, 0
      %v349 = vsel %vm287, %v245, 0
      %v352 = vsel %vm287, %v247, 0
      %v355 = vsel %vm287, %v249, 0
      %v358 = vsel %vm287, %v251, 0
      %v361 = vsel %vm287, %v253, 0
      %v364 = vsel %vm287, %v255, 0
      %v367 = vsel %vm287, %v257, 0
      %v370 = vsel %vm287, %v259, 0
      %v373 = vsel %vm287, %v261, 0
      %v376 = vsel %vm287, %v263, 0
      %v379 = vsel %vm287, %v265, 0
      %v382 = vsel %vm287, %v267, 0
      %vm384 = vcmask 1042432
      %v386 = vsel %vm384, %v286, 0
      %388 = vmatprep.subr.mxu0 0.0
      %389 = vmatpush1.msra.mxu0 %v268
      %390 = vmatprep.subr.mxu0 0.0
      %391 = vmatpush1.msra.mxu0 %v269
      %392 = vmatprep.subr.mxu0 0.0
      %393 = vmatpush1.msra.mxu0 %v270
      %394 = vmatprep.subr.mxu0 0.0
      %395 = vmatpush1.msra.mxu0 %v271
      %396 = vmatprep.subr.mxu0 0.0
      %397 = vmatpush1.msra.mxu0 %v272
      %398 = vmatprep.subr.mxu0 0.0
      %399 = vmatpush1.msra.mxu0 %v273
      %400 = vmatprep.subr.mxu0 0.0
      %401 = vmatpush1.msra.mxu0 %v274
      %402 = vmatprep.subr.mxu0 0.0
      %403 = vmatpush1.msra.mxu0 %v275
      %404 = vmatprep.subr.mxu0 0.0
      %405 = vmatpush1.msra.mxu0 %v276
      %406 = vmatprep.subr.mxu0 0.0
      %407 = vmatpush1.msra.mxu0 %v277
      %408 = vmatprep.subr.mxu0 0.0
      %409 = vmatpush1.msra.mxu0 %v278
      %410 = vmatprep.subr.mxu0 0.0
      %411 = vmatpush1.msra.mxu0 %v279
      %412 = vmatprep.subr.mxu0 0.0
      %413 = vmatpush1.msra.mxu0 %v280
      %414 = vmatprep.subr.mxu0 0.0
      %415 = vmatpush1.msra.mxu0 %v281
      %416 = vmatprep.subr.mxu0 0.0
      %417 = vmatpush1.msra.mxu0 %v282
      %418 = vmatprep.subr.mxu0 0.0
      %419 = vmatpush1.msra.mxu0 %v283
      %420 = vmatprep.subr.mxu0 0.0
      %421 = vmatpush1.msra.mxu0 %v284
      %422 = vmatprep.subr.mxu0 0.0
      %423 = vmatpush1.msra.mxu0 %v285
      %424 = vmatprep.subr.mxu0 0.0
      %425 = vmatpush1.msra.mxu0 %v386
      %426 = vmatprep.subr.mxu0 0.0
      %427 = vmatpush1.msra.mxu0 0.0
      %428 = vmatprep.subr.mxu0 0.0
      %429 = vmatpush1.msra.mxu0 0.0
      %430 = vmatprep.subr.mxu0 0.0
      %431 = vmatpush1.msra.mxu0 0.0
      %432 = vmatprep.subr.mxu0 0.0
      %433 = vmatpush1.msra.mxu0 0.0
      %434 = vmatprep.subr.mxu0 0.0
      %435 = vmatpush1.msra.mxu0 0.0
      %436 = vmatprep.subr.mxu0 0.0
      %437 = vmatpush1.msra.mxu0 0.0
      %438 = vmatprep.subr.mxu0 0.0
      %439 = vmatpush1.msra.mxu0 0.0
      %440 = vmatprep.subr.mxu0 0.0
      %441 = vmatpush1.msra.mxu0 0.0
      %442 = vmatprep.subr.mxu0 0.0
      %443 = vmatpush1.msra.mxu0 0.0
      %444 = vmatprep.subr.mxu0 0.0
      %445 = vmatpush1.msra.mxu0 0.0
      %446 = vmatprep.subr.mxu0 0.0
      %447 = vmatpush1.msra.mxu0 0.0
      %448 = vmatprep.subr.mxu0 0.0
      %449 = vmatpush1.msra.mxu0 0.0
      %450 = vmatprep.subr.mxu0 0.0
      %451 = vmatpush1.msra.mxu0 0.0
      %452 = vmatprep.mubr.f32.mxu0 %v289
      %453 = vmatmul.mubr.f32.gmra.mrb[0].mxu0 %v204
      %v454 = vpop.f32.mrb[0].mxu0
      %v455 = vadd.f32 0.0, %v454
      %v456 = vpop.f32.mrb[0].mxu0
      %457 = vmatprep.mubr.f32.mxu0 %v292
      %458 = vmatmul.mubr.f32.gmra.mrb[0].mxu0 %v206
      %v459 = vpop.f32.mrb[0].mxu0
      %v460 = vadd.f32 0.0, %v459
      %v461 = vpop.f32.mrb[0].mxu0
      %462 = vmatprep.mubr.f32.mxu0 %v295
      %463 = vmatmul.mubr.f32.gmra.mrb[0].mxu0 %v208
      %v464 = vpop.f32.mrb[0].mxu0
      %v465 = vadd.f32 0.0, %v464
      %v466 = vpop.f32.mrb[0].mxu0
      %467 = vmatprep.mubr.f32.mxu0 %v298
      %468 = vmatmul.mubr.f32.gmra.mrb[0].mxu0 %v210
      %v469 = vpop.f32.mrb[0].mxu0
      %v470 = vadd.f32 0.0, %v469
      %v471 = vpop.f32.mrb[0].mxu0
      %472 = vmatprep.mubr.f32.mxu0 %v301
      %473 = vmatmul.mubr.f32.gmra.mrb[0].mxu0 %v212
      %v474 = vpop.f32.mrb[0].mxu0
      %v475 = vadd.f32 0.0, %v474
      %v476 = vpop.f32.mrb[0].mxu0
      %477 = vmatprep.mubr.f32.mxu0 %v304
      %478 = vmatmul.mubr.f32.gmra.mrb[0].mxu0 %v214
      %v479 = vpop.f32.mrb[0].mxu0
      %v480 = vadd.f32 0.0, %v479
      %v481 = vpop.f32.mrb[0].mxu0
      %482 = vmatprep.mubr.f32.mxu0 %v307
      %483 = vmatmul.mubr.f32.gmra.mrb[0].mxu0 %v216
      %v484 = vpop.f32.mrb[0].mxu0
      %v485 = vadd.f32 0.0, %v484
      %v486 = vpop.f32.mrb[0].mxu0
      %487 = vmatprep.mubr.f32.mxu0 %v310
      %488 = vmatmul.mubr.f32.gmra.mrb[0].mxu0 %v218
      %v489 = vpop.f32.mrb[0].mxu0
      %v490 = vadd.f32 0.0, %v489
      %v491 = vpop.f32.mrb[0].mxu0
      %492 = vmatprep.mubr.f32.mxu0 %v313
      %493 = vmatmul.mubr.f32.gmra.mrb[0].mxu0 %v220
      %v494 = vpop.f32.mrb[0].mxu0
      %v495 = vadd.f32 0.0, %v494
      %v496 = vpop.f32.mrb[0].mxu0
      %497 = vmatprep.mubr.f32.mxu0 %v316
      %498 = vmatmul.mubr.f32.gmra.mrb[0].mxu0 %v222
      %v499 = vpop.f32.mrb[0].mxu0
      %v500 = vadd.f32 0.0, %v499
      %v501 = vpop.f32.mrb[0].mxu0
      %502 = vmatprep.mubr.f32.mxu0 %v319
      %503 = vmatmul.mubr.f32.gmra.mrb[0].mxu0 %v224
      %v504 = vpop.f32.mrb[0].mxu0
      %v505 = vadd.f32 0.0, %v504
      %v506 = vpop.f32.mrb[0].mxu0
      %507 = vmatprep.mubr.f32.mxu0 %v322
      %508 = vmatmul.mubr.f32.gmra.mrb[0].mxu0 %v226
      %v509 = vpop.f32.mrb[0].mxu0
      %v510 = vadd.f32 0.0, %v509
      %v511 = vpop.f32.mrb[0].mxu0
      %512 = vmatprep.mubr.f32.mxu0 %v325
      %513 = vmatmul.mubr.f32.gmra.mrb[0].mxu0 %v228
      %v514 = vpop.f32.mrb[0].mxu0
      %v515 = vadd.f32 0.0, %v514
      %v516 = vpop.f32.mrb[0].mxu0
      %517 = vmatprep.mubr.f32.mxu0 %v328
      %518 = vmatmul.mubr.f32.gmra.mrb[0].mxu0 %v230
      %v519 = vpop.f32.mrb[0].mxu0
      %v520 = vadd.f32 0.0, %v519
      %v521 = vpop.f32.mrb[0].mxu0
      %522 = vmatprep.mubr.f32.mxu0 %v331
      %523 = vmatmul.mubr.f32.gmra.mrb[0].mxu0 %v232
      %v524 = vpop.f32.mrb[0].mxu0
      %v525 = vadd.f32 0.0, %v524
      %v526 = vpop.f32.mrb[0].mxu0
      %527 = vmatprep.mubr.f32.mxu0 %v334
      %528 = vmatmul.mubr.f32.gmra.mrb[0].mxu0 %v234
      %v529 = vpop.f32.mrb[0].mxu0
      %v530 = vadd.f32 0.0, %v529
      %v531 = vpop.f32.mrb[0].mxu0
      %532 = vmatprep.mubr.f32.mxu0 %v337
      %533 = vmatmul.mubr.f32.gmra.mrb[0].mxu0 %v236
      %v534 = vpop.f32.mrb[0].mxu0
      %v535 = vadd.f32 0.0, %v534
      %v536 = vpop.f32.mrb[0].mxu0
      %537 = vmatprep.mubr.f32.mxu0 %v340
      %538 = vmatmul.mubr.f32.gmra.mrb[0].mxu0 %v238
      %v539 = vpop.f32.mrb[0].mxu0
      %v540 = vadd.f32 0.0, %v539
      %v541 = vpop.f32.mrb[0].mxu0
      %542 = vmatprep.mubr.f32.mxu0 %v343
      %543 = vmatmul.mubr.f32.gmra.mrb[0].mxu0 %v240
      %v544 = vpop.f32.mrb[0].mxu0
      %v545 = vadd.f32 0.0, %v544
      %v546 = vpop.f32.mrb[0].mxu0
      %547 = vmatprep.mubr.f32.mxu0 %v346
      %548 = vmatmul.mubr.f32.gmra.mrb[0].mxu0 %v242
      %v549 = vpop.f32.mrb[0].mxu0
      %v550 = vadd.f32 0.0, %v549
      %v551 = vpop.f32.mrb[0].mxu0
      %552 = vmatprep.mubr.f32.mxu0 %v349
      %553 = vmatmul.mubr.f32.gmra.mrb[0].mxu0 %v244
      %v554 = vpop.f32.mrb[0].mxu0
      %v555 = vadd.f32 0.0, %v554
      %v556 = vpop.f32.mrb[0].mxu0
      %557 = vmatprep.mubr.f32.mxu0 %v352
      %558 = vmatmul.mubr.f32.gmra.mrb[0].mxu0 %v246
      %v559 = vpop.f32.mrb[0].mxu0
      %v560 = vadd.f32 0.0, %v559
      %v561 = vpop.f32.mrb[0].mxu0
      %562 = vmatprep.mubr.f32.mxu0 %v355
      %563 = vmatmul.mubr.f32.gmra.mrb[0].mxu0 %v248
      %v564 = vpop.f32.mrb[0].mxu0
      %v565 = vadd.f32 0.0, %v564
      %v566 = vpop.f32.mrb[0].mxu0
      %567 = vmatprep.mubr.f32.mxu0 %v358
      %568 = vmatmul.mubr.f32.gmra.mrb[0].mxu0 %v250
      %v569 = vpop.f32.mrb[0].mxu0
      %v570 = vadd.f32 0.0, %v569
      %v571 = vpop.f32.mrb[0].mxu0
      %572 = vmatprep.mubr.f32.mxu0 %v361
      %573 = vmatmul.mubr.f32.gmra.mrb[0].mxu0 %v252
      %v574 = vpop.f32.mrb[0].mxu0
      %v575 = vadd.f32 0.0, %v574
      %v576 = vpop.f32.mrb[0].mxu0
      %577 = vmatprep.mubr.f32.mxu0 %v364
      %578 = vmatmul.mubr.f32.gmra.mrb[0].mxu0 %v254
      %v579 = vpop.f32.mrb[0].mxu0
      %v580 = vadd.f32 0.0, %v579
      %v581 = vpop.f32.mrb[0].mxu0
      %582 = vmatprep.mubr.f32.mxu0 %v367
      %583 = vmatmul.mubr.f32.gmra.mrb[0].mxu0 %v256
      %v584 = vpop.f32.mrb[0].mxu0
      %v585 = vadd.f32 0.0, %v584
      %v586 = vpop.f32.mrb[0].mxu0
      %587 = vmatprep.mubr.f32.mxu0 %v370
      %588 = vmatmul.mubr.f32.gmra.mrb[0].mxu0 %v258
      %v589 = vpop.f32.mrb[0].mxu0
      %v590 = vadd.f32 0.0, %v589
      %v591 = vpop.f32.mrb[0].mxu0
      %592 = vmatprep.mubr.f32.mxu0 %v373
      %593 = vmatmul.mubr.f32.gmra.mrb[0].mxu0 %v260
      %v594 = vpop.f32.mrb[0].mxu0
      %v595 = vadd.f32 0.0, %v594
      %v596 = vpop.f32.mrb[0].mxu0
      %597 = vmatprep.mubr.f32.mxu0 %v376
      %598 = vmatmul.mubr.f32.gmra.mrb[0].mxu0 %v262
      %v599 = vpop.f32.mrb[0].mxu0
      %v600 = vadd.f32 0.0, %v599
      %v601 = vpop.f32.mrb[0].mxu0
      %602 = vmatprep.mubr.f32.mxu0 %v379
      %603 = vmatmul.mubr.f32.gmra.mrb[0].mxu0 %v264
      %v604 = vpop.f32.mrb[0].mxu0
      %v605 = vadd.f32 0.0, %v604
      %v606 = vpop.f32.mrb[0].mxu0
      %607 = vmatprep.mubr.f32.mxu0 %v382
      %608 = vmatmul.mubr.f32.gmra.mrb[0].mxu0 %v266
      %v609 = vpop.f32.mrb[0].mxu0
      %v610 = vadd.f32 0.0, %v609
      %v611 = vpop.f32.mrb[0].mxu0
      %612 = vdwg.mxu0
      %v613 = vld [vmem:[%s2] sm:$0x1]
      %v615 = vlaneseq
      %v616 = vshrl.u32 %v615, 7
      %v617 = vsub.s32 0, %v616
      %v618 = vrot.slane %v613, %v617
      %v620 = vmul.f32 %v455, %v618
      %v621 = vmul.f32 %v460, %v618
      %v622 = vmul.f32 %v465, %v618
      %v623 = vmul.f32 %v470, %v618
      %v624 = vmul.f32 %v475, %v618
      %v625 = vmul.f32 %v480, %v618
      %v626 = vmul.f32 %v485, %v618
      %v627 = vmul.f32 %v490, %v618
      %v628 = vmul.f32 %v495, %v618
      %v629 = vmul.f32 %v500, %v618
      %v630 = vmul.f32 %v505, %v618
      %v631 = vmul.f32 %v510, %v618
      %v632 = vmul.f32 %v515, %v618
      %v633 = vmul.f32 %v520, %v618
      %v634 = vmul.f32 %v525, %v618
      %v635 = vmul.f32 %v530, %v618
      %v636 = vmul.f32 %v535, %v618
      %v637 = vmul.f32 %v540, %v618
      %v638 = vmul.f32 %v545, %v618
      %v639 = vmul.f32 %v550, %v618
      %v640 = vmul.f32 %v555, %v618
      %v641 = vmul.f32 %v560, %v618
      %v642 = vmul.f32 %v565, %v618
      %v643 = vmul.f32 %v570, %v618
      %v644 = vmul.f32 %v575, %v618
      %v645 = vmul.f32 %v580, %v618
      %v646 = vmul.f32 %v585, %v618
      %v647 = vmul.f32 %v590, %v618
      %v648 = vmul.f32 %v595, %v618
      %v649 = vmul.f32 %v600, %v618
      %v650 = vmul.f32 %v605, %v618
      %v651 = vmul.f32 %v610, %v618
      %v652 = vld [vmem:[%s3] sm:$0x1]
      %v654 = vlaneseq
      %v655 = vshrl.u32 %v654, 7
      %v656 = vsub.s32 0, %v655
      %v657 = vrot.slane %v652, %v656
      %v659 = vadd.f32 %v620, %v657
      %v660 = vadd.f32 %v621, %v657
      %v661 = vadd.f32 %v622, %v657
      %v662 = vadd.f32 %v623, %v657
      %v663 = vadd.f32 %v624, %v657
      %v664 = vadd.f32 %v625, %v657
      %v665 = vadd.f32 %v626, %v657
      %v666 = vadd.f32 %v627, %v657
      %v667 = vadd.f32 %v628, %v657
      %v668 = vadd.f32 %v629, %v657
      %v669 = vadd.f32 %v630, %v657
      %v670 = vadd.f32 %v631, %v657
      %v671 = vadd.f32 %v632, %v657
      %v672 = vadd.f32 %v633, %v657
      %v673 = vadd.f32 %v634, %v657
      %v674 = vadd.f32 %v635, %v657
      %v675 = vadd.f32 %v636, %v657
      %v676 = vadd.f32 %v637, %v657
      %v677 = vadd.f32 %v638, %v657
      %v678 = vadd.f32 %v639, %v657
      %v679 = vadd.f32 %v640, %v657
      %v680 = vadd.f32 %v641, %v657
      %v681 = vadd.f32 %v642, %v657
      %v682 = vadd.f32 %v643, %v657
      %v683 = vadd.f32 %v644, %v657
      %v684 = vadd.f32 %v645, %v657
      %v685 = vadd.f32 %v646, %v657
      %v686 = vadd.f32 %v647, %v657
      %v687 = vadd.f32 %v648, %v657
      %v688 = vadd.f32 %v649, %v657
      %v689 = vadd.f32 %v650, %v657
      %v690 = vadd.f32 %v651, %v657
      %v691 = vmax.f32 %v659, 0.0
      %v692 = vmax.f32 %v660, 0.0
      %v693 = vmax.f32 %v661, 0.0
      %v694 = vmax.f32 %v662, 0.0
      %v695 = vmax.f32 %v663, 0.0
      %v696 = vmax.f32 %v664, 0.0
      %v697 = vmax.f32 %v665, 0.0
      %v698 = vmax.f32 %v666, 0.0
      %v699 = vmax.f32 %v667, 0.0
      %v700 = vmax.f32 %v668, 0.0
      %v701 = vmax.f32 %v669, 0.0
      %v702 = vmax.f32 %v670, 0.0
      %v703 = vmax.f32 %v671, 0.0
      %v704 = vmax.f32 %v672, 0.0
      %v705 = vmax.f32 %v673, 0.0
      %v706 = vmax.f32 %v674, 0.0
      %v707 = vmax.f32 %v675, 0.0
      %v708 = vmax.f32 %v676, 0.0
      %v709 = vmax.f32 %v677, 0.0
      %v710 = vmax.f32 %v678, 0.0
      %v711 = vmax.f32 %v679, 0.0
      %v712 = vmax.f32 %v680, 0.0
      %v713 = vmax.f32 %v681, 0.0
      %v714 = vmax.f32 %v682, 0.0
      %v715 = vmax.f32 %v683, 0.0
      %v716 = vmax.f32 %v684, 0.0
      %v717 = vmax.f32 %v685, 0.0
      %v718 = vmax.f32 %v686, 0.0
      %v719 = vmax.f32 %v687, 0.0
      %v720 = vmax.f32 %v688, 0.0
      %v721 = vmax.f32 %v689, 0.0
      %v722 = vmax.f32 %v690, 0.0
      %vm723 = vcmask 523264
      %724 = vst.msk [vmem:[%s202] sm:$0xff] %vm723, %v691
      %725 = vst.msk [vmem:[%s202 + $0x8] sm:$0xff] %vm723, %v692
      %726 = vst.msk [vmem:[%s202 + $0x10] sm:$0xff] %vm723, %v693
      %727 = vst.msk [vmem:[%s202 + $0x18] sm:$0xff] %vm723, %v694
      %728 = vst.msk [vmem:[%s202 + $0x20] sm:$0xff] %vm723, %v695
      %729 = vst.msk [vmem:[%s202 + $0x28] sm:$0xff] %vm723, %v696
      %730 = vst.msk [vmem:[%s202 + $0x30] sm:$0xff] %vm723, %v697
      %731 = vst.msk [vmem:[%s202 + $0x38] sm:$0xff] %vm723, %v698
      %732 = vst.msk [vmem:[%s202 + $0x40] sm:$0xff] %vm723, %v699
      %733 = vst.msk [vmem:[%s202 + $0x48] sm:$0xff] %vm723, %v700
      %734 = vst.msk [vmem:[%s202 + $0x50] sm:$0xff] %vm723, %v701
      %735 = vst.msk [vmem:[%s202 + $0x58] sm:$0xff] %vm723, %v702
      %736 = vst.msk [vmem:[%s202 + $0x60] sm:$0xff] %vm723, %v703
      %737 = vst.msk [vmem:[%s202 + $0x68] sm:$0xff] %vm723, %v704
      %738 = vst.msk [vmem:[%s202 + $0x70] sm:$0xff] %vm723, %v705
      %739 = vst.msk [vmem:[%s202 + $0x78] sm:$0xff] %vm723, %v706
      %740 = vst.msk [vmem:[%s202 + $0x80] sm:$0xff] %vm723, %v707
      %741 = vst.msk [vmem:[%s202 + $0x88] sm:$0xff] %vm723, %v708
      %742 = vst.msk [vmem:[%s202 + $0x90] sm:$0xff] %vm723, %v709
      %743 = vst.msk [vmem:[%s202 + $0x98] sm:$0xff] %vm723, %v710
      %744 = vst.msk [vmem:[%s202 + $0xa0] sm:$0xff] %vm723, %v711
      %745 = vst.msk [vmem:[%s202 + $0xa8] sm:$0xff] %vm723, %v712
      %746 = vst.msk [vmem:[%s202 + $0xb0] sm:$0xff] %vm723, %v713
      %747 = vst.msk [vmem:[%s202 + $0xb8] sm:$0xff] %vm723, %v714
      %748 = vst.msk [vmem:[%s202 + $0xc0] sm:$0xff] %vm723, %v715
      %749 = vst.msk [vmem:[%s202 + $0xc8] sm:$0xff] %vm723, %v716
      %750 = vst.msk [vmem:[%s202 + $0xd0] sm:$0xff] %vm723, %v717
      %751 = vst.msk [vmem:[%s202 + $0xd8] sm:$0xff] %vm723, %v718
      %752 = vst.msk [vmem:[%s202 + $0xe0] sm:$0xff] %vm723, %v719
      %753 = vst.msk [vmem:[%s202 + $0xe8] sm:$0xff] %vm723, %v720
      %754 = vst.msk [vmem:[%s202 + $0xf0] sm:$0xff] %vm723, %v721
      %755 = vst.msk [vmem:[%s202 + $0xf8] sm:$0xff] %vm723, %v722
      %s756 = smul.u32 32, %s15
      %p757 = scmp.lt.s32.totalorder %s756, 63
      %s758 = scalar_select %p757, %s756, 63
      %s759 = smul.addr %s758, 8
      %s760 = scalar_lea.vmem %s4, %s759
      // Predicated region
      $region37: #{stem.1} parent=35 // pred_check
        %p761 = pneg %p122
      $region38: #{stem.1} parent=35 // pred_check_branch
        %763 = sbr.rel (%p761) target = $region40
      $region39: #{stem.1} parent=35 // pred_region
        %s764 = smul.u32 32, %s15
      $region40: #{stem.1} parent=35 // pred_fallthru
        _
    $region36: #{stem.1} parent=5 // pred_fallthru
      _
    %p765 = scmp.le.s32.totalorder 2, %s10
    // Predicated region
    $region41: #{stem.1} parent=5 // pred_check
      %p766 = pneg %p765
    $region42: #{stem.1} parent=5 // pred_check_branch
      %768 = sbr.rel (%p766) target = $region44
    $region43: #{stem.1} parent=5 // pred_region
      %s769 = ssub.s32 %s10, 2
      // Predicated region
      $region45: #{stem.1} parent=43 // pred_check
        %p770 = pneg %p128
      $region46: #{stem.1} parent=43 // pred_check_branch
        %772 = sbr.rel (%p770) target = $region48
      $region47: #{stem.1} parent=43 // pred_region
        %s773 = smul.u32 32, %s16
        %p774 = scmp.lt.s32.totalorder %s773, 63
        %s775 = scalar_select %p774, %s773, 63
        %s776 = smul.addr %s775, 8
        %s777 = scalar_lea.vmem %s4, %s776
      $region48: #{stem.1} parent=43 // pred_fallthru
        _
    $region44: #{stem.1} parent=5 // pred_fallthru
      _
  $region6: #{stem.1} parent=0 // loop_footer
    %s14 = sadd.s32 1, %s10
  $region7: #{stem.1} parent=0 // loop_footer_branch
    %9 = sbr.rel target = $region3
  $region8: #{stem.1} parent=0 // loop_exit
    _

</llo_original>
